<compile_context>
chip_gen: v5e
topology: v5e:2x2
jax: 0.10.0
libtpu: 0.0.40
codegen_flags: <defaults>
</compile_context>

<pallas_src>
import functools
import math

import jax
import jax.numpy as jnp
from jax.experimental import pallas as pl
from jax.experimental.pallas import tpu as pltpu
from jax.scipy.linalg import block_diag


def _make_mha_kernel(bh, d, mxu_dtype):
    """Build the single-invocation MHA kernel for B*H = bh heads of width d."""
    bhd = bh * d

    def kernel(data_ref, w_ref, b_ref, out_ref):
        # data_ref: (L, 2*BH*D)  lane-packed [ g=p1 | p0 ], mxu_dtype
        # w_ref:    (2*BH*D, 2*BH*D) block-diag [BH x (We^T*scale), BH x Wx^T]
        # b_ref:    (1, 2*BH*D) f32, [BH x (b_e*scale) | BH x b_x]
        # out_ref:  (L, BH*D) f32 lane-dense output slab
        data = data_ref[...]

        # Both linear projections in a single full-lane MXU call; bias add and
        # accumulation stay in f32.
        proj = jnp.dot(data, w_ref[...],
                       preferred_element_type=jnp.float32) + b_ref[...]

        # Per-head scaled-dot-product attention.  bh is a small Python int, so
        # this unrolls at trace time; each head is a pair of tiny MXU calls.
        for h in range(bh):
            lo = h * d
            g_h = data[:, lo:lo + d]                       # (L, D) mxu_dtype
            e_h = proj[:, lo:lo + d].astype(mxu_dtype)     # scaled e_tild
            x_h = proj[:, bhd + lo:bhd + lo + d].astype(mxu_dtype)  # x_tild

            # score = g @ e_tild^T : contract the last dims, no transpose.
            s = jax.lax.dot_general(
                g_h, e_h, (((1,), (1,)), ((), ())),
                preferred_element_type=jnp.float32)        # (L, L) f32

            # softmax(dim=-1) in f32 with an exact divide (tiny denominator
            # vector; approx reciprocal only pays off at large widths).
            m = jnp.max(s, axis=-1, keepdims=True)
            p = jnp.exp(s - m)
            attn = p / jnp.sum(p, axis=-1, keepdims=True)

            o_h = jnp.dot(attn.astype(mxu_dtype), x_h,
                          preferred_element_type=jnp.float32)   # (L, D)

            # Place this head's output directly at its lane offset in the
            # packed slab (no jnp.concatenate / extra relayout pass).
            out_ref[:, lo:lo + d] = o_h.astype(out_ref.dtype)

    return kernel


@functools.partial(jax.jit, static_argnames=("mxu_dtype",))
def multi_head_attention(p0, p1, w_e, b_e, w_x, b_x, *,
                         mxu_dtype=jnp.bfloat16):
    """Pallas implementation of MultiHeadAttention.forward((p0, p1)).

    p0, p1: (B, H, L, D); w_e/w_x: (D, D); b_e/b_x: (D,).
    mxu_dtype: operand dtype for the matmuls only (softmax math stays f32).
    """
    B, H, L, D = p0.shape
    assert p1.shape == p0.shape
    BH = B * H
    BHD = BH * D
    f32 = jnp.float32

    # TODO(synk): reference divides by sqrt(d_tensor) with d_tensor == 0;
    # intended scaled-dot-product semantics use sqrt(d_model).
    scale = 1.0 / math.sqrt(D)

    # --- layout plumbing (all fused under this jit) -------------------------
    def pack(t):  # (B, H, L, D) -> (L, BH*D): heads packed onto the lane axis
        return jnp.transpose(t.astype(f32), (2, 0, 1, 3)).reshape(L, BHD)

    # Coalesce the two activations into one lane-packed input slab.
    data = jnp.concatenate([pack(p1), pack(p0)], axis=-1).astype(mxu_dtype)

    # Block-diagonal weight so both projections become one full-lane matmul.
    # The softmax scale is folded into the e-branch weights/bias here (free).
    we_t = jnp.asarray(w_e, f32).T * scale      # y = x @ W^T  ->  x @ we_t
    wx_t = jnp.asarray(w_x, f32).T
    w_big = block_diag(*([we_t] * BH + [wx_t] * BH)).astype(mxu_dtype)
    b_big = jnp.concatenate(
        [jnp.tile(jnp.asarray(b_e, f32) * scale, BH),
         jnp.tile(jnp.asarray(b_x, f32), BH)]).reshape(1, 2 * BHD)

    # --- kernel call ---------------------------------------------------------
    vmem = pl.BlockSpec(memory_space=pltpu.MemorySpace.VMEM)
    out_pk = pl.pallas_call(
        _make_mha_kernel(BH, D, mxu_dtype),
        out_shape=jax.ShapeDtypeStruct((L, BHD), f32),
        in_specs=[vmem, vmem, vmem],
        out_specs=vmem,
    )(data, w_big, b_big)

    # Un-permute the lane-dense (L, BH*D) slab back to (B, H, L, D); fused
    # under jit.  (For the tested shape BH*D == 128, so the slab is a single
    # unmasked (8,128) tile; other shapes remain correct, just less dense.)
    out = out_pk.reshape(L, B, H, D).transpose(1, 2, 0, 3)
    return out.astype(p0.dtype)


def _reference(p0, p1, w_e, b_e, w_x, b_x):
    # Pure-JAX mirror of the PyTorch forward (with the intended sqrt(d) scale).
    e_tild = p1 @ w_e.T + b_e
    x_tild = p0 @ w_x.T + b_x
    d = p1.shape[-1]
    score = (p1 @ jnp.swapaxes(e_tild, -1, -2)) / math.sqrt(d)
    attn = jax.nn.softmax(score, axis=-1)
    return attn @ x_tild


if __name__ == "__main__":
    B, H, L, D = 2, 2, 8, 32   # batch, n_head, seq length, d_model
    key = jax.random.PRNGKey(0)
    k0, k1, k2, k3, k4, k5 = jax.random.split(key, 6)

    p0 = jax.random.normal(k0, (B, H, L, D), dtype=jnp.float32)
    p1 = jax.random.normal(k1, (B, H, L, D), dtype=jnp.float32)

    # Deterministic Linear params (PyTorch-style uniform(-1/sqrt(D), 1/sqrt(D))).
    bound = 1.0 / math.sqrt(D)
    w_e = jax.random.uniform(k2, (D, D), jnp.float32, -bound, bound)
    b_e = jax.random.uniform(k3, (D,), jnp.float32, -bound, bound)
    w_x = jax.random.uniform(k4, (D, D), jnp.float32, -bound, bound)
    b_x = jax.random.uniform(k5, (D,), jnp.float32, -bound, bound)

    ref = _reference(p0, p1, w_e, b_e, w_x, b_x)

    # f32 MXU path: exact softmax divide + f32 matmuls -> tight agreement
    # (residual tolerance only covers MXU-vs-XLA matmul rounding).
    out_f32 = multi_head_attention(p0, p1, w_e, b_e, w_x, b_x,
                                   mxu_dtype=jnp.float32)
    out_f32 = jax.block_until_ready(out_f32)
    assert out_f32.shape == (B, H, L, D)
    assert jnp.allclose(out_f32, ref, atol=2e-3, rtol=2e-3), \
        "f32 kernel mismatch vs reference"

    # Default path: bf16 MXU operands (v6e/v7x-native), f32 softmax math.
    out_bf16 = multi_head_attention(p0, p1, w_e, b_e, w_x, b_x)
    out_bf16 = jax.block_until_ready(out_bf16)
    assert out_bf16.shape == (B, H, L, D)
    assert jnp.allclose(out_bf16, ref, atol=5e-2, rtol=5e-2), \
        "bf16-MXU kernel mismatch vs reference"

    print("KERNEL_OK")
</pallas_src>

<mosaic_0001>
module attributes {stable_mosaic.version = 11 : i64} {
  func.func @kernel(%arg0: memref<8x256xf32, #tpu.memory_space<vmem>>, %arg1: memref<256x256xf32, #tpu.memory_space<vmem>>, %arg2: memref<1x256xf32, #tpu.memory_space<vmem>>, %arg3: memref<8x128xf32, #tpu.memory_space<vmem>>) attributes {dimension_semantics = [], scalar_prefetch = 0 : i64, scratch_operands = 0 : i64, tpu.core_type = #tpu.core_type<tc>} {
    %c0 = arith.constant 0 : index
    %c0_0 = arith.constant 0 : index
    %0 = vector.load %arg0[%c0, %c0_0] : memref<8x256xf32, #tpu.memory_space<vmem>>, vector<8x256xf32>
    %c0_1 = arith.constant 0 : index
    %c0_2 = arith.constant 0 : index
    %1 = vector.load %arg1[%c0_1, %c0_2] : memref<256x256xf32, #tpu.memory_space<vmem>>, vector<256x256xf32>
    %cst = arith.constant dense<0.000000e+00> : vector<8x256xf32>
    %2 = tpu.matmul %0, %1, %cst {dimension_numbers = #tpu.dot_dimension_numbers<[1], [0], [0], [1], [0, 0, 1, 1], [], []>} : vector<8x256xf32>, vector<256x256xf32>, vector<8x256xf32> -> vector<8x256xf32>
    %c0_3 = arith.constant 0 : index
    %c0_4 = arith.constant 0 : index
    %3 = vector.load %arg2[%c0_3, %c0_4] : memref<1x256xf32, #tpu.memory_space<vmem>>, vector<1x256xf32>
    %4 = vector.broadcast %3 : vector<1x256xf32> to vector<8x256xf32>
    %5 = arith.addf %2, %4 : vector<8x256xf32>
    %6 = vector.extract_strided_slice %0 {offsets = [0, 0], sizes = [8, 32], strides = [1, 1]} : vector<8x256xf32> to vector<8x32xf32>
    %7 = vector.extract_strided_slice %5 {offsets = [0, 0], sizes = [8, 32], strides = [1, 1]} : vector<8x256xf32> to vector<8x32xf32>
    %8 = vector.extract_strided_slice %5 {offsets = [0, 128], sizes = [8, 32], strides = [1, 1]} : vector<8x256xf32> to vector<8x32xf32>
    %cst_5 = arith.constant dense<0.000000e+00> : vector<8x8xf32>
    %9 = tpu.matmul %6, %7, %cst_5 {dimension_numbers = #tpu.dot_dimension_numbers<[1], [1], [0], [0], [0, 0, 1, 0], [], []>} : vector<8x32xf32>, vector<8x32xf32>, vector<8x8xf32> -> vector<8x8xf32>
    %cst_6 = arith.constant dense<0xFF800000> : vector<8xf32>
    %10 = vector.multi_reduction <maximumf>, %9, %cst_6 [1] : vector<8x8xf32> to vector<8xf32>
    %11 = vector.shape_cast %10 : vector<8xf32> to vector<8x1xf32>
    %12 = vector.broadcast %11 : vector<8x1xf32> to vector<8x8xf32>
    %13 = arith.subf %9, %12 : vector<8x8xf32>
    %14 = math.exp %13 : vector<8x8xf32>
    %cst_7 = arith.constant dense<0.000000e+00> : vector<8xf32>
    %15 = vector.multi_reduction <add>, %14, %cst_7 [1] : vector<8x8xf32> to vector<8xf32>
    %16 = vector.shape_cast %15 : vector<8xf32> to vector<8x1xf32>
    %17 = vector.broadcast %16 : vector<8x1xf32> to vector<8x8xf32>
    %18 = arith.divf %14, %17 : vector<8x8xf32>
    %cst_8 = arith.constant dense<0.000000e+00> : vector<8x32xf32>
    %19 = tpu.matmul %18, %8, %cst_8 {dimension_numbers = #tpu.dot_dimension_numbers<[1], [0], [0], [1], [0, 0, 1, 1], [], []>} : vector<8x8xf32>, vector<8x32xf32>, vector<8x32xf32> -> vector<8x32xf32>
    %c0_9 = arith.constant 0 : index
    %c0_10 = arith.constant 0 : index
    %20 = vector.load %arg3[%c0_9, %c0_10] : memref<8x128xf32, #tpu.memory_space<vmem>>, vector<8x32xf32>
    tpu.vector_store %arg3[%c0_9, %c0_10], %19 {strides = array<i32>} : memref<8x128xf32, #tpu.memory_space<vmem>>, vector<8x32xf32>,
    %21 = vector.extract_strided_slice %0 {offsets = [0, 32], sizes = [8, 32], strides = [1, 1]} : vector<8x256xf32> to vector<8x32xf32>
    %22 = vector.extract_strided_slice %5 {offsets = [0, 32], sizes = [8, 32], strides = [1, 1]} : vector<8x256xf32> to vector<8x32xf32>
    %23 = vector.extract_strided_slice %5 {offsets = [0, 160], sizes = [8, 32], strides = [1, 1]} : vector<8x256xf32> to vector<8x32xf32>
    %cst_11 = arith.constant dense<0.000000e+00> : vector<8x8xf32>
    %24 = tpu.matmul %21, %22, %cst_11 {dimension_numbers = #tpu.dot_dimension_numbers<[1], [1], [0], [0], [0, 0, 1, 0], [], []>} : vector<8x32xf32>, vector<8x32xf32>, vector<8x8xf32> -> vector<8x8xf32>
    %cst_12 = arith.constant dense<0xFF800000> : vector<8xf32>
    %25 = vector.multi_reduction <maximumf>, %24, %cst_12 [1] : vector<8x8xf32> to vector<8xf32>
    %26 = vector.shape_cast %25 : vector<8xf32> to vector<8x1xf32>
    %27 = vector.broadcast %26 : vector<8x1xf32> to vector<8x8xf32>
    %28 = arith.subf %24, %27 : vector<8x8xf32>
    %29 = math.exp %28 : vector<8x8xf32>
    %cst_13 = arith.constant dense<0.000000e+00> : vector<8xf32>
    %30 = vector.multi_reduction <add>, %29, %cst_13 [1] : vector<8x8xf32> to vector<8xf32>
    %31 = vector.shape_cast %30 : vector<8xf32> to vector<8x1xf32>
    %32 = vector.broadcast %31 : vector<8x1xf32> to vector<8x8xf32>
    %33 = arith.divf %29, %32 : vector<8x8xf32>
    %cst_14 = arith.constant dense<0.000000e+00> : vector<8x32xf32>
    %34 = tpu.matmul %33, %23, %cst_14 {dimension_numbers = #tpu.dot_dimension_numbers<[1], [0], [0], [1], [0, 0, 1, 1], [], []>} : vector<8x8xf32>, vector<8x32xf32>, vector<8x32xf32> -> vector<8x32xf32>
    %c0_15 = arith.constant 0 : index
    %c32 = arith.constant 32 : index
    %35 = vector.load %arg3[%c0_15, %c32] : memref<8x128xf32, #tpu.memory_space<vmem>>, vector<8x32xf32>
    tpu.vector_store %arg3[%c0_15, %c32], %34 {strides = array<i32>} : memref<8x128xf32, #tpu.memory_space<vmem>>, vector<8x32xf32>,
    %36 = vector.extract_strided_slice %0 {offsets = [0, 64], sizes = [8, 32], strides = [1, 1]} : vector<8x256xf32> to vector<8x32xf32>
    %37 = vector.extract_strided_slice %5 {offsets = [0, 64], sizes = [8, 32], strides = [1, 1]} : vector<8x256xf32> to vector<8x32xf32>
    %38 = vector.extract_strided_slice %5 {offsets = [0, 192], sizes = [8, 32], strides = [1, 1]} : vector<8x256xf32> to vector<8x32xf32>
    %cst_16 = arith.constant dense<0.000000e+00> : vector<8x8xf32>
    %39 = tpu.matmul %36, %37, %cst_16 {dimension_numbers = #tpu.dot_dimension_numbers<[1], [1], [0], [0], [0, 0, 1, 0], [], []>} : vector<8x32xf32>, vector<8x32xf32>, vector<8x8xf32> -> vector<8x8xf32>
    %cst_17 = arith.constant dense<0xFF800000> : vector<8xf32>
    %40 = vector.multi_reduction <maximumf>, %39, %cst_17 [1] : vector<8x8xf32> to vector<8xf32>
    %41 = vector.shape_cast %40 : vector<8xf32> to vector<8x1xf32>
    %42 = vector.broadcast %41 : vector<8x1xf32> to vector<8x8xf32>
    %43 = arith.subf %39, %42 : vector<8x8xf32>
    %44 = math.exp %43 : vector<8x8xf32>
    %cst_18 = arith.constant dense<0.000000e+00> : vector<8xf32>
    %45 = vector.multi_reduction <add>, %44, %cst_18 [1] : vector<8x8xf32> to vector<8xf32>
    %46 = vector.shape_cast %45 : vector<8xf32> to vector<8x1xf32>
    %47 = vector.broadcast %46 : vector<8x1xf32> to vector<8x8xf32>
    %48 = arith.divf %44, %47 : vector<8x8xf32>
    %cst_19 = arith.constant dense<0.000000e+00> : vector<8x32xf32>
    %49 = tpu.matmul %48, %38, %cst_19 {dimension_numbers = #tpu.dot_dimension_numbers<[1], [0], [0], [1], [0, 0, 1, 1], [], []>} : vector<8x8xf32>, vector<8x32xf32>, vector<8x32xf32> -> vector<8x32xf32>
    %c0_20 = arith.constant 0 : index
    %c64 = arith.constant 64 : index
    %50 = vector.load %arg3[%c0_20, %c64] : memref<8x128xf32, #tpu.memory_space<vmem>>, vector<8x32xf32>
    tpu.vector_store %arg3[%c0_20, %c64], %49 {strides = array<i32>} : memref<8x128xf32, #tpu.memory_space<vmem>>, vector<8x32xf32>,
    %51 = vector.extract_strided_slice %0 {offsets = [0, 96], sizes = [8, 32], strides = [1, 1]} : vector<8x256xf32> to vector<8x32xf32>
    %52 = vector.extract_strided_slice %5 {offsets = [0, 96], sizes = [8, 32], strides = [1, 1]} : vector<8x256xf32> to vector<8x32xf32>
    %53 = vector.extract_strided_slice %5 {offsets = [0, 224], sizes = [8, 32], strides = [1, 1]} : vector<8x256xf32> to vector<8x32xf32>
    %cst_21 = arith.constant dense<0.000000e+00> : vector<8x8xf32>
    %54 = tpu.matmul %51, %52, %cst_21 {dimension_numbers = #tpu.dot_dimension_numbers<[1], [1], [0], [0], [0, 0, 1, 0], [], []>} : vector<8x32xf32>, vector<8x32xf32>, vector<8x8xf32> -> vector<8x8xf32>
    %cst_22 = arith.constant dense<0xFF800000> : vector<8xf32>
    %55 = vector.multi_reduction <maximumf>, %54, %cst_22 [1] : vector<8x8xf32> to vector<8xf32>
    %56 = vector.shape_cast %55 : vector<8xf32> to vector<8x1xf32>
    %57 = vector.broadcast %56 : vector<8x1xf32> to vector<8x8xf32>
    %58 = arith.subf %54, %57 : vector<8x8xf32>
    %59 = math.exp %58 : vector<8x8xf32>
    %cst_23 = arith.constant dense<0.000000e+00> : vector<8xf32>
    %60 = vector.multi_reduction <add>, %59, %cst_23 [1] : vector<8x8xf32> to vector<8xf32>
    %61 = vector.shape_cast %60 : vector<8xf32> to vector<8x1xf32>
    %62 = vector.broadcast %61 : vector<8x1xf32> to vector<8x8xf32>
    %63 = arith.divf %59, %62 : vector<8x8xf32>
    %cst_24 = arith.constant dense<0.000000e+00> : vector<8x32xf32>
    %64 = tpu.matmul %63, %53, %cst_24 {dimension_numbers = #tpu.dot_dimension_numbers<[1], [0], [0], [1], [0, 0, 1, 1], [], []>} : vector<8x8xf32>, vector<8x32xf32>, vector<8x32xf32> -> vector<8x32xf32>
    %c0_25 = arith.constant 0 : index
    %c96 = arith.constant 96 : index
    %65 = vector.load %arg3[%c0_25, %c96] : memref<8x128xf32, #tpu.memory_space<vmem>>, vector<8x32xf32>
    tpu.vector_store %arg3[%c0_25, %c96], %64 {strides = array<i32>} : memref<8x128xf32, #tpu.memory_space<vmem>>, vector<8x32xf32>,
    return
  }
}

</mosaic_0001>

<llo_original>
// kernel: tile.13
$region0: #{tile.13}
  #allocation0 [shape = 's32[1]{0}', space=sflag, size = 0x4, scoped, tag = 'scoped memory for tile.13']
  %s0 = inlined_call_operand.vmem [shape: f32[32], index: 0, kind: input, shape index: {}]
  %s1 = inlined_call_operand.vmem [shape: f32[4,32], index: 1, kind: output, shape index: {}]
  // Predicated region
  $region2: #{tile.13} parent=0 // pred_check
    _
  $region3: #{tile.13} parent=0 // pred_check_branch
    %3 = sbr.rel (0) target = $region5
  $region4: #{tile.13} parent=0 // pred_region
    _
  $region5: #{tile.13} parent=0 // pred_fallthru
    _
  %v4 = vld [vmem:[%s0] ss:$0 sm:$0xff]
  %5 = vst [vmem:[%s1] sm:$0xf] %v4

// kernel: tile.14
$region0: #{tile.14}
  %s0 = inlined_call_operand.vmem [shape: f32[4,32], index: 0, kind: input, shape index: {}]
  %s1 = inlined_call_operand.vmem [shape: f32[128], index: 1, kind: output, shape index: {}]
  $region1: #{tile.14} parent=0
    #allocation0 [shape = 'u8[4096]{0}', space=vmem, size = 0x1000, scoped, tag = 'scoped mem for output reshape']
    #allocation1 [shape = 'u8[4096]{0}', space=vmem, size = 0x1000, scoped, tag = 'scoped mem for input reshape']
    %s3 = ssub.s32 16, 1
    %v4 = vld [vmem:[%s0] sm:%s3]
    %5 = vst [vmem:[#allocation1] sm:%s3] %v4
    %v6 = vld [vmem:[#allocation1] sm:$0x1]
    %vm7 = vcmask 261120
    %8 = vst.msk [vmem:[#allocation0] sm:$0x1] %vm7, %v6
    %s9 = scalar_lea.vmem [#allocation1], 3
    %v10 = vld [vmem:[%s9] sm:$0x1]
    %11 = vrot.lane.b32.xlu0 %v10, 96
    %v12 = vpop.permute.xlu0 %11
    %vm13 = vcmask 1048320
    %14 = vst.msk [vmem:[#allocation0] sm:$0x1] %vm13, %v12
    %s15 = scalar_lea.vmem [#allocation1], 2
    %v16 = vld [vmem:[%s15] sm:$0x1]
    %17 = vrot.lane.b32.xlu0 %v16, 64
    %v18 = vpop.permute.xlu0 %17
    %vm19 = vcmask 785920
    %20 = vst.msk [vmem:[#allocation0] sm:$0x1] %vm19, %v18
    %s21 = scalar_lea.vmem [#allocation1], 1
    %v22 = vld [vmem:[%s21] sm:$0x1]
    %23 = vrot.lane.b32.xlu0 %v22, 32
    %v24 = vpop.permute.xlu0 %23
    %vm25 = vcmask 523520
    %26 = vst.msk [vmem:[#allocation0] sm:$0x1] %vm25, %v24
    %s28 = ssub.s32 2, 1
    %v29 = vld [vmem:[#allocation0] sm:%s28]
    %s31 = ssub.s32 2, 1
    %32 = vst [vmem:[%s1] sm:%s31] %v29

// kernel: multi_head_attention.1
$region0: #{multi_head_attention.1}
  #allocation0 [shape = 'u32[]', space=smem, size = 0x4, offset = 0x4, fixed_abs, tag = 'smem constant byte address 0x4 - core index']
  #allocation1 [shape = 'u32[72,128]{1,0:T(1,128)}', space=vmem, size = 0x9000, scoped, tag = 'internal scratch']
  %s0 = inlined_call_operand.vmem [shape: f32[8,256], index: 0, kind: input, shape index: {}]
  %s1 = inlined_call_operand.vmem [shape: f32[256,256], index: 1, kind: input, shape index: {}]
  %s2 = inlined_call_operand.vmem [shape: f32[1,256], index: 2, kind: input, shape index: {}]
  %s3 = inlined_call_operand.vmem [shape: f32[8,128], index: 3, kind: output, shape index: {}]
  %s4 = sld [smem:[#allocation0]]
  $region22: #{multi_head_attention.1} parent=0
    _
  %s6 = ssub.s32 1, %s4
  %s7 = scalar_select 0, %s6, %s4
  // Predicated region
  $region2: #{multi_head_attention.1} parent=0 // pred_check
    _
  $region3: #{multi_head_attention.1} parent=0 // pred_check_branch
    %9 = sbr.rel (0) target = $region5
  $region4: #{multi_head_attention.1} parent=0 // pred_region
    _
  $region5: #{multi_head_attention.1} parent=0 // pred_fallthru
    _
  // Predicated region
  $region6: #{multi_head_attention.1} parent=0 // pred_check
    _
  $region7: #{multi_head_attention.1} parent=0 // pred_check_branch
    %11 = sbr.rel (0) target = $region9
  $region8: #{multi_head_attention.1} parent=0 // pred_region
    _
  $region9: #{multi_head_attention.1} parent=0 // pred_fallthru
    _
  // Predicated region
  $region10: #{multi_head_attention.1} parent=0 // pred_check
    _
  $region11: #{multi_head_attention.1} parent=0 // pred_check_branch
    %13 = sbr.rel (0) target = $region13
  $region12: #{multi_head_attention.1} parent=0 // pred_region
    _
  $region13: #{multi_head_attention.1} parent=0 // pred_fallthru
    _
  %v14 = vld [vmem:[%s0] sm:$0xff]
  %v15 = vld [vmem:[%s0 + $0x8] sm:$0xff]
  %v16 = vld [vmem:[%s1] sm:$0xff]
  %v17 = vld [vmem:[%s1 + $0x8] sm:$0xff]
  %v18 = vld [vmem:[%s1 + $0x10] sm:$0xff]
  %v19 = vld [vmem:[%s1 + $0x18] sm:$0xff]
  %v20 = vld [vmem:[%s1 + $0x20] sm:$0xff]
  %v21 = vld [vmem:[%s1 + $0x28] sm:$0xff]
  %v22 = vld [vmem:[%s1 + $0x30] sm:$0xff]
  %v23 = vld [vmem:[%s1 + $0x38] sm:$0xff]
  %v24 = vld [vmem:[%s1 + $0x40] sm:$0xff]
  %v25 = vld [vmem:[%s1 + $0x48] sm:$0xff]
  %v26 = vld [vmem:[%s1 + $0x50] sm:$0xff]
  %v27 = vld [vmem:[%s1 + $0x58] sm:$0xff]
  %v28 = vld [vmem:[%s1 + $0x60] sm:$0xff]
  %v29 = vld [vmem:[%s1 + $0x68] sm:$0xff]
  %v30 = vld [vmem:[%s1 + $0x70] sm:$0xff]
  %v31 = vld [vmem:[%s1 + $0x78] sm:$0xff]
  %v32 = vld [vmem:[%s1 + $0x80] sm:$0xff]
  %v33 = vld [vmem:[%s1 + $0x88] sm:$0xff]
  %v34 = vld [vmem:[%s1 + $0x90] sm:$0xff]
  %v35 = vld [vmem:[%s1 + $0x98] sm:$0xff]
  %v36 = vld [vmem:[%s1 + $0xa0] sm:$0xff]
  %v37 = vld [vmem:[%s1 + $0xa8] sm:$0xff]
  %v38 = vld [vmem:[%s1 + $0xb0] sm:$0xff]
  %v39 = vld [vmem:[%s1 + $0xb8] sm:$0xff]
  %v40 = vld [vmem:[%s1 + $0xc0] sm:$0xff]
  %v41 = vld [vmem:[%s1 + $0xc8] sm:$0xff]
  %v42 = vld [vmem:[%s1 + $0xd0] sm:$0xff]
  %v43 = vld [vmem:[%s1 + $0xd8] sm:$0xff]
  %v44 = vld [vmem:[%s1 + $0xe0] sm:$0xff]
  %v45 = vld [vmem:[%s1 + $0xe8] sm:$0xff]
  %v46 = vld [vmem:[%s1 + $0xf0] sm:$0xff]
  %v47 = vld [vmem:[%s1 + $0xf8] sm:$0xff]
  %v48 = vld [vmem:[%s1 + $0x100] sm:$0xff]
  %v49 = vld [vmem:[%s1 + $0x108] sm:$0xff]
  %v50 = vld [vmem:[%s1 + $0x110] sm:$0xff]
  %v51 = vld [vmem:[%s1 + $0x118] sm:$0xff]
  %v52 = vld [vmem:[%s1 + $0x120] sm:$0xff]
  %v53 = vld [vmem:[%s1 + $0x128] sm:$0xff]
  %v54 = vld [vmem:[%s1 + $0x130] sm:$0xff]
  %v55 = vld [vmem:[%s1 + $0x138] sm:$0xff]
  %v56 = vld [vmem:[%s1 + $0x140] sm:$0xff]
  %v57 = vld [vmem:[%s1 + $0x148] sm:$0xff]
  %v58 = vld [vmem:[%s1 + $0x150] sm:$0xff]
  %v59 = vld [vmem:[%s1 + $0x158] sm:$0xff]
  %v60 = vld [vmem:[%s1 + $0x160] sm:$0xff]
  %v61 = vld [vmem:[%s1 + $0x168] sm:$0xff]
  %v62 = vld [vmem:[%s1 + $0x170] sm:$0xff]
  %v63 = vld [vmem:[%s1 + $0x178] sm:$0xff]
  %v64 = vld [vmem:[%s1 + $0x180] sm:$0xff]
  %v65 = vld [vmem:[%s1 + $0x188] sm:$0xff]
  %v66 = vld [vmem:[%s1 + $0x190] sm:$0xff]
  %v67 = vld [vmem:[%s1 + $0x198] sm:$0xff]
  %v68 = vld [vmem:[%s1 + $0x1a0] sm:$0xff]
  %v69 = vld [vmem:[%s1 + $0x1a8] sm:$0xff]
  %v70 = vld [vmem:[%s1 + $0x1b0] sm:$0xff]
  %v71 = vld [vmem:[%s1 + $0x1b8] sm:$0xff]
  %v72 = vld [vmem:[%s1 + $0x1c0] sm:$0xff]
  %v73 = vld [vmem:[%s1 + $0x1c8] sm:$0xff]
  %v74 = vld [vmem:[%s1 + $0x1d0] sm:$0xff]
  %v75 = vld [vmem:[%s1 + $0x1d8] sm:$0xff]
  %v76 = vld [vmem:[%s1 + $0x1e0] sm:$0xff]
  %v77 = vld [vmem:[%s1 + $0x1e8] sm:$0xff]
  %v78 = vld [vmem:[%s1 + $0x1f0] sm:$0xff]
  %v79 = vld [vmem:[%s1 + $0x1f8] sm:$0xff]
  %v80 = vld [vmem:[%s2] sm:$0x3]
  %v82 = vperm.slane %v80, 0
  %v83 = vperm.slane %v80, 1
  %86 = vmatpush.msra.mxu0 %v46
  %87 = vmatpush.msra.mxu0 %v44
  %88 = vmatpush.msra.mxu0 %v42
  %89 = vmatpush.msra.mxu0 %v40
  %90 = vmatpush.msra.mxu0 %v38
  %91 = vmatpush.msra.mxu0 %v36
  %92 = vmatpush.msra.mxu0 %v34
  %93 = vmatpush.msra.mxu0 %v32
  %94 = vmatpush.msra.mxu0 %v30
  %95 = vmatpush.msra.mxu0 %v28
  %96 = vmatpush.msra.mxu0 %v26
  %97 = vmatpush.msra.mxu0 %v24
  %98 = vmatpush.msra.mxu0 %v22
  %99 = vmatpush.msra.mxu0 %v20
  %100 = vmatpush.msra.mxu0 %v18
  %101 = vmatpush.msra.mxu0 %v16
  %102 = vmatmul.f32.gmra.mxu0 %v14
  %v103 = vpop.f32.mrf.mxu0
  %v104 = vadd.f32 %v82, %v103
  %105 = vdwg.mxu0
  %106 = vmatpush.msra.mxu0 %v78
  %107 = vmatpush.msra.mxu0 %v76
  %108 = vmatpush.msra.mxu0 %v74
  %109 = vmatpush.msra.mxu0 %v72
  %110 = vmatpush.msra.mxu0 %v70
  %111 = vmatpush.msra.mxu0 %v68
  %112 = vmatpush.msra.mxu0 %v66
  %113 = vmatpush.msra.mxu0 %v64
  %114 = vmatpush.msra.mxu0 %v62
  %115 = vmatpush.msra.mxu0 %v60
  %116 = vmatpush.msra.mxu0 %v58
  %117 = vmatpush.msra.mxu0 %v56
  %118 = vmatpush.msra.mxu0 %v54
  %119 = vmatpush.msra.mxu0 %v52
  %120 = vmatpush.msra.mxu0 %v50
  %121 = vmatpush.msra.mxu0 %v48
  %122 = vmatmul.f32.gmra.mxu0 %v15
  %v123 = vpop.f32.mrf.mxu0
  %v124 = vadd.f32 %v104, %v123
  %125 = vdwg.mxu0
  %126 = vmatpush.msra.mxu0 %v47
  %127 = vmatpush.msra.mxu0 %v45
  %128 = vmatpush.msra.mxu0 %v43
  %129 = vmatpush.msra.mxu0 %v41
  %130 = vmatpush.msra.mxu0 %v39
  %131 = vmatpush.msra.mxu0 %v37
  %132 = vmatpush.msra.mxu0 %v35
  %133 = vmatpush.msra.mxu0 %v33
  %134 = vmatpush.msra.mxu0 %v31
  %135 = vmatpush.msra.mxu0 %v29
  %136 = vmatpush.msra.mxu0 %v27
  %137 = vmatpush.msra.mxu0 %v25
  %138 = vmatpush.msra.mxu0 %v23
  %139 = vmatpush.msra.mxu0 %v21
  %140 = vmatpush.msra.mxu0 %v19
  %141 = vmatpush.msra.mxu0 %v17
  %142 = vmatmul.f32.gmra.mxu0 %v14
  %v143 = vpop.f32.mrf.mxu0
  %v144 = vadd.f32 %v83, %v143
  %145 = vdwg.mxu0
  %146 = vmatpush.msra.mxu0 %v79
  %147 = vmatpush.msra.mxu0 %v77
  %148 = vmatpush.msra.mxu0 %v75
  %149 = vmatpush.msra.mxu0 %v73
  %150 = vmatpush.msra.mxu0 %v71
  %151 = vmatpush.msra.mxu0 %v69
  %152 = vmatpush.msra.mxu0 %v67
  %153 = vmatpush.msra.mxu0 %v65
  %154 = vmatpush.msra.mxu0 %v63
  %155 = vmatpush.msra.mxu0 %v61
  %156 = vmatpush.msra.mxu0 %v59
  %157 = vmatpush.msra.mxu0 %v57
  %158 = vmatpush.msra.mxu0 %v55
  %159 = vmatpush.msra.mxu0 %v53
  %160 = vmatpush.msra.mxu0 %v51
  %161 = vmatpush.msra.mxu0 %v49
  %162 = vmatmul.f32.gmra.mxu0 %v15
  %v163 = vpop.f32.mrf.mxu0
  %v164 = vadd.f32 %v144, %v163
  %165 = vdwg.mxu0
  %vm166 = vcmask 261120
  %v168 = vsel %vm166, %v14, 0
  %v171 = vsel %vm166, %v124, 0
  %173 = vmatpush.xpose.msra.mxu0 0.0
  %174 = vmatpush.xpose.msra.mxu0 0.0
  %175 = vmatpush.xpose.msra.mxu0 0.0
  %176 = vmatpush.xpose.msra.mxu0 0.0
  %177 = vmatpush.xpose.msra.mxu0 0.0
  %178 = vmatpush.xpose.msra.mxu0 0.0
  %179 = vmatpush.xpose.msra.mxu0 0.0
  %180 = vmatpush.xpose.msra.mxu0 0.0
  %181 = vmatpush.xpose.msra.mxu0 0.0
  %182 = vmatpush.xpose.msra.mxu0 0.0
  %183 = vmatpush.xpose.msra.mxu0 0.0
  %184 = vmatpush.xpose.msra.mxu0 0.0
  %185 = vmatpush.xpose.msra.mxu0 0.0
  %186 = vmatpush.xpose.msra.mxu0 0.0
  %187 = vmatpush.xpose.msra.mxu0 0.0
  %188 = vmatpush.xpose.msra.mxu0 %v171
  %189 = vmatmul.f32.gmra.mxu0 %v168
  %v190 = vpop.f32.mrf.mxu0
  %v191 = vadd.f32 0.0, %v190
  %192 = vdwg.mxu0
  %vm193 = vcmask 64512
  %v194 = vsel %vm193, %v191, -inf
  %195 = vmax.xlane.f32.xlu0 %v194
  %v196 = vpop.xlane.xlu0 %195
  %v197 = vsub.f32 %v191, %v196
  %v198 = vmul.f32 %v197, 1.442695
  %v199 = vpow.pop %v198
  %v200 = vsel %vm193, %v199, 0.0
  %201 = vadd.xlane.f32.xlu0 %v200
  %v202 = vpop.xlane.xlu0 %201
  %v203 = vrcp.pop %v202
  %v204 = vmul.f32 %v202, %v203
  %v205 = vsub.f32 1.0, %v204
  %v206 = vmul.f32 %v203, %v205
  %v207 = vadd.f32 %v203, %v206
  %vm208 = vweird.f32 %v202
  %vm209 = vweird.f32 %v203
  %vm210 = vmor %vm208, %vm209
  %v211 = vsel %vm210, %v203, %v207
  %v212 = vand.u32 2147483647, %v202
  %vm213 = vcmp.eq.f32.partialorder %v212, 8.507059e+37
  %v214 = vand.u32 %v202, 2147483648
  %v215 = vor.u32 1.1754944e-38, %v214
  %v216 = vsel %vm213, %v215, %v211
  %v217 = vmul.f32 %v199, %v216
  %v219 = vsel %vm193, %v217, 0
  %221 = vmatpush.msra.mxu0 0.0
  %222 = vmatpush.msra.mxu0 0.0
  %223 = vmatpush.msra.mxu0 0.0
  %224 = vmatpush.msra.mxu0 0.0
  %225 = vmatpush.msra.mxu0 0.0
  %226 = vmatpush.msra.mxu0 0.0
  %227 = vmatpush.msra.mxu0 0.0
  %228 = vmatpush.msra.mxu0 0.0
  %229 = vmatpush.msra.mxu0 0.0
  %230 = vmatpush.msra.mxu0 0.0
  %231 = vmatpush.msra.mxu0 0.0
  %232 = vmatpush.msra.mxu0 0.0
  %233 = vmatpush.msra.mxu0 0.0
  %234 = vmatpush.msra.mxu0 0.0
  %235 = vmatpush.msra.mxu0 0.0
  %236 = vmatpush.msra.mxu0 %v164
  %237 = vmatmul.f32.gmra.mxu0 %v219
  %v238 = vpop.f32.mrf.mxu0
  %v239 = vadd.f32 0.0, %v238
  %240 = vdwg.mxu0
  %241 = vst.msk [vmem:[%s3] sm:$0xff] %vm166, %v239
  %242 = vrot.lane.b32.xlu0 %v14, 96
  %v243 = vpop.permute.xlu0 %242
  %244 = vrot.lane.b32.xlu0 %v124, 96
  %v245 = vpop.permute.xlu0 %244
  %v246 = vsel %vm166, %v243, 0
  %v248 = vsel %vm166, %v245, 0
  %250 = vmatpush.xpose.msra.mxu0 0.0
  %251 = vmatpush.xpose.msra.mxu0 0.0
  %252 = vmatpush.xpose.msra.mxu0 0.0
  %253 = vmatpush.xpose.msra.mxu0 0.0
  %254 = vmatpush.xpose.msra.mxu0 0.0
  %255 = vmatpush.xpose.msra.mxu0 0.0
  %256 = vmatpush.xpose.msra.mxu0 0.0
  %257 = vmatpush.xpose.msra.mxu0 0.0
  %258 = vmatpush.xpose.msra.mxu0 0.0
  %259 = vmatpush.xpose.msra.mxu0 0.0
  %260 = vmatpush.xpose.msra.mxu0 0.0
  %261 = vmatpush.xpose.msra.mxu0 0.0
  %262 = vmatpush.xpose.msra.mxu0 0.0
  %263 = vmatpush.xpose.msra.mxu0 0.0
  %264 = vmatpush.xpose.msra.mxu0 0.0
  %265 = vmatpush.xpose.msra.mxu0 %v248
  %266 = vmatmul.f32.gmra.mxu0 %v246
  %v267 = vpop.f32.mrf.mxu0
  %v268 = vadd.f32 0.0, %v267
  %269 = vdwg.mxu0
  %v270 = vsel %vm193, %v268, -inf
  %271 = vmax.xlane.f32.xlu0 %v270
  %v272 = vpop.xlane.xlu0 %271
  %v273 = vsub.f32 %v268, %v272
  %v274 = vmul.f32 %v273, 1.442695
  %v275 = vpow.pop %v274
  %v276 = vsel %vm193, %v275, 0.0
  %277 = vadd.xlane.f32.xlu0 %v276
  %v278 = vpop.xlane.xlu0 %277
  %v279 = vrcp.pop %v278
  %v280 = vmul.f32 %v278, %v279
  %v281 = vsub.f32 1.0, %v280
  %v282 = vmul.f32 %v279, %v281
  %v283 = vadd.f32 %v279, %v282
  %vm284 = vweird.f32 %v278
  %vm285 = vweird.f32 %v279
  %vm286 = vmor %vm284, %vm285
  %v287 = vsel %vm286, %v279, %v283
  %v288 = vand.u32 2147483647, %v278
  %vm289 = vcmp.eq.f32.partialorder %v288, 8.507059e+37
  %v290 = vand.u32 %v278, 2147483648
  %v291 = vor.u32 1.1754944e-38, %v290
  %v292 = vsel %vm289, %v291, %v287
  %v293 = vmul.f32 %v275, %v292
  %295 = vrot.lane.b32.xlu0 %v164, 96
  %v296 = vpop.permute.xlu0 %295
  %v299 = vsel %vm193, %v293, 0
  %301 = vmatpush.msra.mxu0 0.0
  %302 = vmatpush.msra.mxu0 0.0
  %303 = vmatpush.msra.mxu0 0.0
  %304 = vmatpush.msra.mxu0 0.0
  %305 = vmatpush.msra.mxu0 0.0
  %306 = vmatpush.msra.mxu0 0.0
  %307 = vmatpush.msra.mxu0 0.0
  %308 = vmatpush.msra.mxu0 0.0
  %309 = vmatpush.msra.mxu0 0.0
  %310 = vmatpush.msra.mxu0 0.0
  %311 = vmatpush.msra.mxu0 0.0
  %312 = vmatpush.msra.mxu0 0.0
  %313 = vmatpush.msra.mxu0 0.0
  %314 = vmatpush.msra.mxu0 0.0
  %315 = vmatpush.msra.mxu0 0.0
  %316 = vmatpush.msra.mxu0 %v296
  %317 = vmatmul.f32.gmra.mxu0 %v299
  %v318 = vpop.f32.mrf.mxu0
  %v319 = vadd.f32 0.0, %v318
  %320 = vdwg.mxu0
  %322 = vrot.lane.b32.xlu0 %v319, 32
  %v323 = vpop.permute.xlu0 %322
  %vm325 = vcmask 523520
  %326 = vst.msk [vmem:[%s3] sm:$0xff] %vm325, %v323
  %327 = vrot.lane.b32.xlu0 %v14, 64
  %v328 = vpop.permute.xlu0 %327
  %329 = vrot.lane.b32.xlu0 %v124, 64
  %v330 = vpop.permute.xlu0 %329
  %v331 = vsel %vm166, %v328, 0
  %v333 = vsel %vm166, %v330, 0
  %335 = vmatpush.xpose.msra.mxu0 0.0
  %336 = vmatpush.xpose.msra.mxu0 0.0
  %337 = vmatpush.xpose.msra.mxu0 0.0
  %338 = vmatpush.xpose.msra.mxu0 0.0
  %339 = vmatpush.xpose.msra.mxu0 0.0
  %340 = vmatpush.xpose.msra.mxu0 0.0
  %341 = vmatpush.xpose.msra.mxu0 0.0
  %342 = vmatpush.xpose.msra.mxu0 0.0
  %343 = vmatpush.xpose.msra.mxu0 0.0
  %344 = vmatpush.xpose.msra.mxu0 0.0
  %345 = vmatpush.xpose.msra.mxu0 0.0
  %346 = vmatpush.xpose.msra.mxu0 0.0
  %347 = vmatpush.xpose.msra.mxu0 0.0
  %348 = vmatpush.xpose.msra.mxu0 0.0
  %349 = vmatpush.xpose.msra.mxu0 0.0
  %350 = vmatpush.xpose.msra.mxu0 %v333
  %351 = vmatmul.f32.gmra.mxu0 %v331
  %v352 = vpop.f32.mrf.mxu0
  %v353 = vadd.f32 0.0, %v352
  %354 = vdwg.mxu0
  %v355 = vsel %vm193, %v353, -inf
  %356 = vmax.xlane.f32.xlu0 %v355
  %v357 = vpop.xlane.xlu0 %356
  %v358 = vsub.f32 %v353, %v357
  %v359 = vmul.f32 %v358, 1.442695
  %v360 = vpow.pop %v359
  %v361 = vsel %vm193, %v360, 0.0
  %362 = vadd.xlane.f32.xlu0 %v361
  %v363 = vpop.xlane.xlu0 %362
  %v364 = vrcp.pop %v363
  %v365 = vmul.f32 %v363, %v364
  %v366 = vsub.f32 1.0, %v365
  %v367 = vmul.f32 %v364, %v366
  %v368 = vadd.f32 %v364, %v367
  %vm369 = vweird.f32 %v363
  %vm370 = vweird.f32 %v364
  %vm371 = vmor %vm369, %vm370
  %v372 = vsel %vm371, %v364, %v368
  %v373 = vand.u32 2147483647, %v363
  %vm374 = vcmp.eq.f32.partialorder %v373, 8.507059e+37
  %v375 = vand.u32 %v363, 2147483648
  %v376 = vor.u32 1.1754944e-38, %v375
  %v377 = vsel %vm374, %v376, %v372
  %v378 = vmul.f32 %v360, %v377
  %379 = vrot.lane.b32.xlu0 %v164, 64
  %v380 = vpop.permute.xlu0 %379
  %v383 = vsel %vm193, %v378, 0
  %385 = vmatpush.msra.mxu0 0.0
  %386 = vmatpush.msra.mxu0 0.0
  %387 = vmatpush.msra.mxu0 0.0
  %388 = vmatpush.msra.mxu0 0.0
  %389 = vmatpush.msra.mxu0 0.0
  %390 = vmatpush.msra.mxu0 0.0
  %391 = vmatpush.msra.mxu0 0.0
  %392 = vmatpush.msra.mxu0 0.0
  %393 = vmatpush.msra.mxu0 0.0
  %394 = vmatpush.msra.mxu0 0.0
  %395 = vmatpush.msra.mxu0 0.0
  %396 = vmatpush.msra.mxu0 0.0
  %397 = vmatpush.msra.mxu0 0.0
  %398 = vmatpush.msra.mxu0 0.0
  %399 = vmatpush.msra.mxu0 0.0
  %400 = vmatpush.msra.mxu0 %v380
  %401 = vmatmul.f32.gmra.mxu0 %v383
  %v402 = vpop.f32.mrf.mxu0
  %v403 = vadd.f32 0.0, %v402
  %404 = vdwg.mxu0
  %406 = vrot.lane.b32.xlu0 %v403, 64
  %v407 = vpop.permute.xlu0 %406
  %vm409 = vcmask 785920
  %410 = vst.msk [vmem:[%s3] sm:$0xff] %vm409, %v407
  %411 = vrot.lane.b32.xlu0 %v14, 32
  %v412 = vpop.permute.xlu0 %411
  %413 = vrot.lane.b32.xlu0 %v124, 32
  %v414 = vpop.permute.xlu0 %413
  %v415 = vsel %vm166, %v412, 0
  %v417 = vsel %vm166, %v414, 0
  %419 = vmatpush.xpose.msra.mxu0 0.0
  %420 = vmatpush.xpose.msra.mxu0 0.0
  %421 = vmatpush.xpose.msra.mxu0 0.0
  %422 = vmatpush.xpose.msra.mxu0 0.0
  %423 = vmatpush.xpose.msra.mxu0 0.0
  %424 = vmatpush.xpose.msra.mxu0 0.0
  %425 = vmatpush.xpose.msra.mxu0 0.0
  %426 = vmatpush.xpose.msra.mxu0 0.0
  %427 = vmatpush.xpose.msra.mxu0 0.0
  %428 = vmatpush.xpose.msra.mxu0 0.0
  %429 = vmatpush.xpose.msra.mxu0 0.0
  %430 = vmatpush.xpose.msra.mxu0 0.0
  %431 = vmatpush.xpose.msra.mxu0 0.0
  %432 = vmatpush.xpose.msra.mxu0 0.0
  %433 = vmatpush.xpose.msra.mxu0 0.0
  %434 = vmatpush.xpose.msra.mxu0 %v417
  %435 = vmatmul.f32.gmra.mxu0 %v415
  %v436 = vpop.f32.mrf.mxu0
  %v437 = vadd.f32 0.0, %v436
  %438 = vdwg.mxu0
  %v439 = vsel %vm193, %v437, -inf
  %440 = vmax.xlane.f32.xlu0 %v439
  %v441 = vpop.xlane.xlu0 %440
  %v442 = vsub.f32 %v437, %v441
  %v443 = vmul.f32 %v442, 1.442695
  %v444 = vpow.pop %v443
  %v445 = vsel %vm193, %v444, 0.0
  %446 = vadd.xlane.f32.xlu0 %v445
  %v447 = vpop.xlane.xlu0 %446
  %v448 = vrcp.pop %v447
  %v449 = vmul.f32 %v447, %v448
  %v450 = vsub.f32 1.0, %v449
  %v451 = vmul.f32 %v448, %v450
  %v452 = vadd.f32 %v448, %v451
  %vm453 = vweird.f32 %v447
  %vm454 = vweird.f32 %v448
  %vm455 = vmor %vm453, %vm454
  %v456 = vsel %vm455, %v448, %v452
  %v457 = vand.u32 2147483647, %v447
  %vm458 = vcmp.eq.f32.partialorder %v457, 8.507059e+37
  %v459 = vand.u32 %v447, 2147483648
  %v460 = vor.u32 1.1754944e-38, %v459
  %v461 = vsel %vm458, %v460, %v456
  %v462 = vmul.f32 %v444, %v461
  %463 = vrot.lane.b32.xlu0 %v164, 32
  %v464 = vpop.permute.xlu0 %463
  %v467 = vsel %vm193, %v462, 0
  %469 = vmatpush.msra.mxu0 0.0
  %470 = vmatpush.msra.mxu0 0.0
  %471 = vmatpush.msra.mxu0 0.0
  %472 = vmatpush.msra.mxu0 0.0
  %473 = vmatpush.msra.mxu0 0.0
  %474 = vmatpush.msra.mxu0 0.0
  %475 = vmatpush.msra.mxu0 0.0
  %476 = vmatpush.msra.mxu0 0.0
  %477 = vmatpush.msra.mxu0 0.0
  %478 = vmatpush.msra.mxu0 0.0
  %479 = vmatpush.msra.mxu0 0.0
  %480 = vmatpush.msra.mxu0 0.0
  %481 = vmatpush.msra.mxu0 0.0
  %482 = vmatpush.msra.mxu0 0.0
  %483 = vmatpush.msra.mxu0 0.0
  %484 = vmatpush.msra.mxu0 %v464
  %485 = vmatmul.f32.gmra.mxu0 %v467
  %v486 = vpop.f32.mrf.mxu0
  %v487 = vadd.f32 0.0, %v486
  %488 = vdwg.mxu0
  %490 = vrot.lane.b32.xlu0 %v487, 96
  %v491 = vpop.permute.xlu0 %490
  %vm493 = vcmask 1048320
  %494 = vst.msk [vmem:[%s3] sm:$0xff] %vm493, %v491
  // Predicated region
  $region14: #{multi_head_attention.1} parent=0 // pred_check
    _
  $region15: #{multi_head_attention.1} parent=0 // pred_check_branch
    %496 = sbr.rel (0) target = $region17
  $region16: #{multi_head_attention.1} parent=0 // pred_region
    _
  $region17: #{multi_head_attention.1} parent=0 // pred_fallthru
    _
  // Predicated region
  $region18: #{multi_head_attention.1} parent=0 // pred_check
    _
  $region19: #{multi_head_attention.1} parent=0 // pred_check_branch
    %498 = sbr.rel (0) target = $region21
  $region20: #{multi_head_attention.1} parent=0 // pred_region
    _
  $region21: #{multi_head_attention.1} parent=0 // pred_fallthru
    _

</llo_original>
